<compile_context>
chip_gen: v7x
topology: tpu7x:2x2x1
jax: 0.10.0
libtpu: 0.0.40
codegen_flags: <defaults>
</compile_context>

<pallas_src>
import jax
import jax.numpy as jnp
from jax.experimental import pallas as pl
from jax.experimental.pallas import tpu as pltpu

_LANES = 128
_SUBLANES = 8


def _copy_kernel(x_ref, o_ref):
    # Identity copy of the current tile.
    o_ref[...] = x_ref[...]


def _resolve_size(total, size):
    """Torch-style view size resolution (supports a single -1)."""
    size = list(size)
    if size.count(-1) > 1:
        raise ValueError("only one dimension can be inferred")
    if -1 in size:
        known = 1
        for s in size:
            if s != -1:
                known *= s
        if known == 0 or total % known != 0:
            raise ValueError(f"cannot view {total} elements as {size}")
        size[size.index(-1)] = total // known
    prod = 1
    for s in size:
        prod *= s
    if prod != total:
        raise ValueError(f"view size {size} incompatible with {total} elements")
    return tuple(size)


def _pallas_copy_flat(x_flat):
    """Identity copy of a flat array through a tiled, lane-dense Pallas kernel."""
    total = x_flat.shape[0]
    itemsize = jnp.dtype(x_flat.dtype).itemsize

    # Sub-32-bit dtypes pack along sublanes: align rows to 8 * packing factor
    # (8 for f32, 16 for bf16, 32 for int8/fp8).
    packing = max(1, 4 // itemsize)
    align_rows = _SUBLANES * packing
    align_elems = align_rows * _LANES

    padded = ((total + align_elems - 1) // align_elems) * align_elems
    if padded != total:
        x_flat = jnp.pad(x_flat, (0, padded - total))
    rows = padded // _LANES

    # ~2 MiB per pipeline buffer: big enough to sit on the flat part of the
    # tile-size/bandwidth curve on v5e/v6e, small enough for v7x's VMEM.
    target_rows = max(align_rows, (2 * 1024 * 1024) // (_LANES * itemsize))
    tile_rows = min(rows, target_rows)
    tile_rows = max(align_rows, (tile_rows // align_rows) * align_rows)

    x2d = x_flat.reshape(rows, _LANES)
    grid = (pl.cdiv(rows, tile_rows),)

    out2d = pl.pallas_call(
        _copy_kernel,
        out_shape=jax.ShapeDtypeStruct((rows, _LANES), x2d.dtype),
        grid_spec=pltpu.PrefetchScalarGridSpec(
            num_scalar_prefetch=0,
            grid=grid,
            in_specs=[pl.BlockSpec((tile_rows, _LANES), lambda i: (i, 0))],
            out_specs=pl.BlockSpec((tile_rows, _LANES), lambda i: (i, 0)),
        ),
        compiler_params=pltpu.CompilerParams(
            dimension_semantics=("parallel",),
        ),
        input_output_aliases={0: 0},
        cost_estimate=pl.CostEstimate(
            flops=0,
            transcendentals=0,
            bytes_accessed=2 * padded * itemsize,
        ),
    )(x2d)

    out_flat = out2d.reshape(padded)
    if padded != total:
        out_flat = out_flat[:total]
    return out_flat


def view_pallas(x, size, *, copy=False):
    """Equivalent of `x.view(size)`.

    copy=False (default): metadata-only reshape — exact torch.view semantics
    for contiguous inputs, zero HBM traffic.
    copy=True: materialize the viewed tensor via the tuned Pallas copy kernel.
    """
    out_shape = _resolve_size(x.size, size)
    if not copy:
        return x.reshape(out_shape)
    flat = _pallas_copy_flat(x.reshape(-1))
    return flat.reshape(out_shape)


class ViewPallas:
    """Mirror of the PyTorch View module (no parameters)."""

    def __init__(self, size, copy=False):
        self.size = size
        self.copy = copy

    def __call__(self, x):
        return view_pallas(x, self.size, copy=self.copy)


if __name__ == "__main__":
    key = jax.random.PRNGKey(0)
    # NCHW input, as produced by a conv stack: (batch=2, channels=4, 16, 16)
    x = jax.random.normal(key, (2, 4, 16, 16), dtype=jnp.float32)
    ref = x.reshape(-1, 4 * 16 * 16)

    # Default forward: metadata-only view (fastest path, per review).
    mod = ViewPallas((-1, 4 * 16 * 16))
    y = jax.block_until_ready(mod(x))
    assert y.shape == ref.shape, (y.shape, ref.shape)
    assert y.dtype == ref.dtype
    assert bool(jnp.all(y == ref))

    # Pallas copy path: exercises the tuned identity-copy kernel.
    mod_copy = ViewPallas((-1, 4 * 16 * 16), copy=True)
    y2 = jax.block_until_ready(mod_copy(x))
    assert y2.shape == ref.shape and y2.dtype == ref.dtype
    assert bool(jnp.all(y2 == ref))

    # Exercise the padded (non-multiple-of-1024) + packed-dtype path too.
    xb = jax.random.normal(jax.random.PRNGKey(0), (3, 5, 7), dtype=jnp.bfloat16)
    yb = jax.block_until_ready(view_pallas(xb, (5, -1), copy=True))
    assert yb.shape == (5, 21) and yb.dtype == xb.dtype
    assert bool(jnp.all(yb == xb.reshape(5, -1)))

    print("KERNEL_OK")
</pallas_src>

<mosaic_0001>
module attributes {stable_mosaic.version = 11 : i64} {
  func.func @_copy_kernel(%arg0: i32, %arg1: memref<16x128xf32, #tpu.memory_space<vmem>>, %arg2: memref<16x128xf32, #tpu.memory_space<vmem>>) attributes {dimension_semantics = [#tpu.dimension_semantics<parallel>], iteration_bounds = array<i64: 1>, scalar_prefetch = 0 : i64, scratch_operands = 0 : i64, tpu.core_type = #tpu.core_type<tc>, window_params = [{transform_indices = @transform_0, window_bounds = array<i64: 16, 128>}, {transform_indices = @transform_1, window_bounds = array<i64: 16, 128>}]} {
    %c0 = arith.constant 0 : index
    %c0_0 = arith.constant 0 : index
    %0 = vector.load %arg1[%c0, %c0_0] : memref<16x128xf32, #tpu.memory_space<vmem>>, vector<16x128xf32>
    %c0_1 = arith.constant 0 : index
    %c0_2 = arith.constant 0 : index
    %1 = vector.load %arg2[%c0_1, %c0_2] : memref<16x128xf32, #tpu.memory_space<vmem>>, vector<16x128xf32>
    tpu.vector_store %arg2[%c0_1, %c0_2], %0 {strides = array<i32>} : memref<16x128xf32, #tpu.memory_space<vmem>>, vector<16x128xf32>,
    return
  }
  func.func @transform_0(%arg0: i32) -> (i32, i32) {
    %c0_i32 = arith.constant 0 : i32
    %c0_i32_0 = arith.constant 0 : i32
    return %arg0, %c0_i32 : i32, i32
  }
  func.func @transform_1(%arg0: i32) -> (i32, i32) {
    %c0_i32 = arith.constant 0 : i32
    %c0_i32_0 = arith.constant 0 : i32
    return %arg0, %c0_i32 : i32, i32
  }
}

</mosaic_0001>

<llo_original>
// kernel: tpu_custom_call.1
$region0: #{tpu_custom_call.1}
  #allocation0 [shape = 'u32[]', space=smem, size = 0x4, offset = 0x4, fixed_abs, tag = 'smem constant byte address 0x4 - core index']
  #allocation1 [shape = 'u32[144,128]{1,0:T(1,128)}', space=vmem, size = 0x12000, scoped, tag = 'internal scratch']
  %s0 = inlined_call_operand.hbm [shape: f32[16,128], index: 0, kind: input, shape index: {}, may-alias: {0,1}]
  %s1 = inlined_call_operand.hbm [shape: f32[16,128], index: 1, kind: output, shape index: {}, may-alias: {0,1}]
  %s2 = sld [smem:[#allocation0]]
  $region18: #{tpu_custom_call.1} parent=0
    _
  %s4 = ssub.s32 1, %s2
  %s5 = scalar_select 0, %s4, %s2
  $region1: #{tpu_custom_call.1} parent=0
    #allocation2 [shape = 'u8[8192]{0}', space=vmem, size = 0x2000, scoped, tag = 'input window, operand 0, single buffered']
    #allocation3 [shape = 's32[1]{0}', space=sflag, size = 0x4, scoped, tag = 'scoped memory for tpu_custom_call.1']
    #allocation4 [shape = 's32[1]{0}', space=sflag, size = 0x4, scoped, tag = 'scoped memory for tpu_custom_call.1']
    #allocation5 [shape = 'u8[8192]{0}', space=vmem, size = 0x2000, scoped, tag = 'output window, operand 0, single buffered']
    %6 = vsyncpa [#allocation3], 0
    %7 = vsyncpa [#allocation4], 0
    // Predicated region
    $region2: #{tpu_custom_call.1} parent=1 // pred_check
      _
    $region3: #{tpu_custom_call.1} parent=1 // pred_check_branch
      %9 = sbr.rel (0) target = $region5
    $region4: #{tpu_custom_call.1} parent=1 // pred_region
      %s11 = ssub.s32 256, 256
      %12 = vsyncadd [#allocation3], %s11
      %s13 = sshll.u32 [#allocation2], 4
      %s14 = int_to_ptr.vmem [resolvable:$true] %s13
      %19 = dma.hbm_to_vmem [thread:$0]  %s0, 256, %s14, [#allocation3], 128, 128, 8
    $region5: #{tpu_custom_call.1} parent=1 // pred_fallthru
      _
    // Predicated region
    $region6: #{tpu_custom_call.1} parent=1 // pred_check
      _
    $region7: #{tpu_custom_call.1} parent=1 // pred_check_branch
      %21 = sbr.rel (0) target = $region9
    $region8: #{tpu_custom_call.1} parent=1 // pred_region
      %22 = dma.done [#allocation3], 256
    $region9: #{tpu_custom_call.1} parent=1 // pred_fallthru
      _
    %v23 = vld [vmem:[#allocation2] sm:$0xff]
    %v24 = vld [vmem:[#allocation2 + $0x8] sm:$0xff]
    %25 = vst [vmem:[#allocation5] sm:$0xff] %v23
    %26 = vst [vmem:[#allocation5 + $0x8] sm:$0xff] %v24
    // Predicated region
    $region10: #{tpu_custom_call.1} parent=1 // pred_check
      _
    $region11: #{tpu_custom_call.1} parent=1 // pred_check_branch
      %28 = sbr.rel (0) target = $region13
    $region12: #{tpu_custom_call.1} parent=1 // pred_region
      %s30 = ssub.s32 256, 256
      %31 = vsyncadd [#allocation4], %s30
      %s32 = sshll.u32 [#allocation5], 4
      %s33 = int_to_ptr.vmem [resolvable:$true] %s32
      %38 = dma.vmem_to_hbm [thread:$0]  %s33, 256, %s1, [#allocation4], 128, 128, 8
    $region13: #{tpu_custom_call.1} parent=1 // pred_fallthru
      _
    // Predicated region
    $region14: #{tpu_custom_call.1} parent=1 // pred_check
      _
    $region15: #{tpu_custom_call.1} parent=1 // pred_check_branch
      %40 = sbr.rel (0) target = $region17
    $region16: #{tpu_custom_call.1} parent=1 // pred_region
      %41 = dma.done [#allocation4], 256
    $region17: #{tpu_custom_call.1} parent=1 // pred_fallthru
      _
    %42 = vsyncpa [#allocation3], 1
    %43 = vsyncpa [#allocation4], 1

</llo_original>
